<compile_context>
chip_gen: v7x
topology: tpu7x:2x2x1
jax: 0.10.0
libtpu: 0.0.40
codegen_flags: <defaults>
</compile_context>

<pallas_src>
import functools

import jax
import jax.numpy as jnp
from jax.experimental import pallas as pl
from jax.experimental.pallas import tpu as pltpu

BN_EPS = 1e-5
LEAKY_SLOPE = 0.2


def _round_up(n, m):
    return (n + m - 1) // m * m


def _leaky_relu(x):
    # LeakyReLU(0.2) == max(x, 0.2*x): 2 VALU ops instead of cmp+mul+select.
    return jnp.maximum(x, LEAKY_SLOPE * x)


# ---------------------------------------------------------------------------
# Kernel: three MXU matmuls (bf16 in, f32 accumulate) with an f32 epilogue.
# BN is already folded into (w1, b1) / (w2, b2); Dropout is identity in eval.
# ---------------------------------------------------------------------------
def classifier_kernel(x_ref, w1_ref, b1_ref, w2_ref, b2_ref, w3_ref, b3_ref, o_ref):
    # x arrives as f32 straight from the caller; cast to the MXU compute dtype
    # here (avoids a separate wrapper-side pad/cast pass over HBM).
    x = x_ref[...].astype(w1_ref.dtype)

    # Layer 1: Linear(+folded BN) -> LeakyReLU   (Dropout == identity in eval)
    h = jnp.dot(x, w1_ref[...], preferred_element_type=jnp.float32) + b1_ref[...]
    h = _leaky_relu(h).astype(w2_ref.dtype)

    # Layer 2: Linear(+folded BN) -> LeakyReLU
    h = jnp.dot(h, w2_ref[...], preferred_element_type=jnp.float32) + b2_ref[...]
    h = _leaky_relu(h).astype(w3_ref.dtype)

    # Layer 3: Linear -> LeakyReLU, stored at the TRUE output width (12 B/row).
    h = jnp.dot(h, w3_ref[...], preferred_element_type=jnp.float32) + b3_ref[...]
    o_ref[...] = _leaky_relu(h).astype(o_ref.dtype)


# ---------------------------------------------------------------------------
# Wrapper-side parameter preparation: fold eval-mode BN into the weights and
# cast to the compute dtype (biases stay f32 for the f32 epilogue).
# ---------------------------------------------------------------------------
def fold_params(params, compute_dtype=jnp.bfloat16):
    s1 = params["bn1_gamma"] * jax.lax.rsqrt(params["bn1_var"] + BN_EPS)   # (1, H1)
    w1 = params["w1"] * s1                                                  # (F, H1)
    b1 = (params["b1"] - params["bn1_mean"]) * s1 + params["bn1_beta"]      # (1, H1)

    s2 = params["bn2_gamma"] * jax.lax.rsqrt(params["bn2_var"] + BN_EPS)
    w2 = params["w2"] * s2
    b2 = (params["b2"] - params["bn2_mean"]) * s2 + params["bn2_beta"]

    return (
        w1.astype(compute_dtype), b1.astype(jnp.float32),
        w2.astype(compute_dtype), b2.astype(jnp.float32),
        params["w3"].astype(compute_dtype), params["b3"].astype(jnp.float32),
    )


def _choose_tiling(B):
    """Batch tile: multiple of 16, <=512 rows, >=2 grid steps when B > 16
    (so both v7x TensorCores are used), and minimal batch-padding waste."""
    if B <= 16:
        return 16, 16
    n_steps = max(2, pl.cdiv(B, 512))
    block_b = _round_up(pl.cdiv(B, n_steps), 16)
    return block_b, _round_up(B, block_b)


@functools.partial(jax.jit, static_argnames=("compute_dtype",))
def classifier_forward(x, params, compute_dtype=jnp.bfloat16):
    B, F = x.shape

    w1, b1, w2, b2, w3, b3 = fold_params(params, compute_dtype)
    H1, H2, OUT = w1.shape[1], w2.shape[1], w3.shape[1]

    block_b, Bp = _choose_tiling(B)
    if Bp != B:
        # Padded rows compute leaky_relu(bias-propagated garbage) and are sliced
        # off below; anyone removing that slice must mask/zero the pad rows.
        x = jnp.pad(x, ((0, Bp - B), (0, 0)))

    grid = (Bp // block_b,)
    batch_map = lambda i: (i, 0)
    const_map = lambda i: (0, 0)   # constant block index => weights stay resident

    weight_bytes = ((F * H1 + H1 * H2 + H2 * OUT) * jnp.dtype(compute_dtype).itemsize
                    + (H1 + H2 + OUT) * 4)
    cost = pl.CostEstimate(
        flops=2 * Bp * (F * H1 + H1 * H2 + H2 * OUT),
        transcendentals=0,
        bytes_accessed=Bp * F * 4 + weight_bytes + Bp * OUT * 4,
    )

    out = pl.pallas_call(
        classifier_kernel,
        out_shape=jax.ShapeDtypeStruct((Bp, OUT), jnp.float32),
        grid_spec=pltpu.PrefetchScalarGridSpec(
            num_scalar_prefetch=0,
            grid=grid,
            in_specs=[
                pl.BlockSpec((block_b, F), batch_map),   # x tile (f32, cast in-kernel)
                pl.BlockSpec((F, H1), const_map),        # w1 (BN folded, bf16)
                pl.BlockSpec((1, H1), const_map),        # b1 (BN folded, f32)
                pl.BlockSpec((H1, H2), const_map),       # w2 (BN folded, bf16)
                pl.BlockSpec((1, H2), const_map),        # b2 (BN folded, f32)
                pl.BlockSpec((H2, OUT), const_map),      # w3 (bf16, true width)
                pl.BlockSpec((1, OUT), const_map),       # b3 (f32, true width)
            ],
            out_specs=pl.BlockSpec((block_b, OUT), batch_map),
        ),
        compiler_params=pltpu.CompilerParams(
            dimension_semantics=("parallel",),
        ),
        cost_estimate=cost,
    )(x, w1, b1, w2, b2, w3, b3)

    # Only the batch padding (if any) needs stripping; no column slice anymore.
    return out if Bp == B else out[:B]


# ---------------------------------------------------------------------------
# Parameter init (PyTorch-style uniform +/- 1/sqrt(fan_in); weights stored
# transposed as (in_features, out_features); BN at PyTorch defaults).
# ---------------------------------------------------------------------------
def init_params(key, input_size, output_num):
    def linear(key, fan_in, fan_out):
        kw, kb = jax.random.split(key)
        bound = 1.0 / jnp.sqrt(fan_in)
        w = jax.random.uniform(kw, (fan_in, fan_out), jnp.float32, -bound, bound)
        b = jax.random.uniform(kb, (1, fan_out), jnp.float32, -bound, bound)
        return w, b

    k1, k2, k3 = jax.random.split(key, 3)
    w1, b1 = linear(k1, input_size, 512)
    w2, b2 = linear(k2, 512, 256)
    w3, b3 = linear(k3, 256, output_num)

    return dict(
        w1=w1, b1=b1,
        bn1_gamma=jnp.ones((1, 512), jnp.float32),
        bn1_beta=jnp.zeros((1, 512), jnp.float32),
        bn1_mean=jnp.zeros((1, 512), jnp.float32),
        bn1_var=jnp.ones((1, 512), jnp.float32),
        w2=w2, b2=b2,
        bn2_gamma=jnp.ones((1, 256), jnp.float32),
        bn2_beta=jnp.zeros((1, 256), jnp.float32),
        bn2_mean=jnp.zeros((1, 256), jnp.float32),
        bn2_var=jnp.ones((1, 256), jnp.float32),
        w3=w3, b3=b3,
    )


# ---------------------------------------------------------------------------
# References
# ---------------------------------------------------------------------------
def reference_forward(x, p):
    """Pure-JAX f32 reference of the eval-mode PyTorch forward."""
    def bn(h, g, b, m, v):
        return (h - m) * (g * jax.lax.rsqrt(v + BN_EPS)) + b

    h = x @ p["w1"] + p["b1"]
    h = bn(h, p["bn1_gamma"], p["bn1_beta"], p["bn1_mean"], p["bn1_var"])
    h = _leaky_relu(h)
    h = h @ p["w2"] + p["b2"]
    h = bn(h, p["bn2_gamma"], p["bn2_beta"], p["bn2_mean"], p["bn2_var"])
    h = _leaky_relu(h)
    h = h @ p["w3"] + p["b3"]
    return _leaky_relu(h)


def reference_forward_folded(x, folded):
    """Reference that mirrors the kernel's bf16 quantization exactly (f32 math)."""
    w1, b1, w2, b2, w3, b3 = folded
    f32 = jnp.float32
    h = x.astype(w1.dtype).astype(f32)
    h = _leaky_relu(h @ w1.astype(f32) + b1)
    h = _leaky_relu(h.astype(w2.dtype).astype(f32) @ w2.astype(f32) + b2)
    h = _leaky_relu(h.astype(w3.dtype).astype(f32) @ w3.astype(f32) + b3)
    return h


if __name__ == "__main__":
    INPUT_SIZE = 32    # stands in for x.shape[1] - 3 from the dataloader
    OUTPUT_NUM = 3     # opt.output_num (includes_qg == 'true')
    BATCH = 8

    key = jax.random.PRNGKey(0)
    kx, kp = jax.random.split(key)
    x = jax.random.normal(kx, (BATCH, INPUT_SIZE), jnp.float32)
    params = init_params(kp, INPUT_SIZE, OUTPUT_NUM)

    out = jax.block_until_ready(classifier_forward(x, params))
    assert out.shape == (BATCH, OUTPUT_NUM)

    # Exact-ish check against a reference that applies the same folding / bf16 rounding.
    ref_q = reference_forward_folded(x, fold_params(params, jnp.bfloat16))
    assert jnp.allclose(out, ref_q, atol=2e-3, rtol=2e-3), "mismatch vs folded/bf16 reference"

    # Sanity check against the full-precision eval-mode reference (bf16 tolerance).
    ref = reference_forward(x, params)
    assert jnp.allclose(out, ref, atol=5e-2, rtol=5e-2), "mismatch vs f32 reference"

    print("KERNEL_OK")
</pallas_src>

<mosaic_0001>
module attributes {stable_mosaic.version = 11 : i64} {
  func.func @classifier_kernel(%arg0: i32, %arg1: memref<16x32xf32, #tpu.memory_space<vmem>>, %arg2: memref<32x512xbf16, #tpu.memory_space<vmem>>, %arg3: memref<1x512xf32, #tpu.memory_space<vmem>>, %arg4: memref<512x256xbf16, #tpu.memory_space<vmem>>, %arg5: memref<1x256xf32, #tpu.memory_space<vmem>>, %arg6: memref<256x3xbf16, #tpu.memory_space<vmem>>, %arg7: memref<1x3xf32, #tpu.memory_space<vmem>>, %arg8: memref<16x3xf32, #tpu.memory_space<vmem>>) attributes {dimension_semantics = [#tpu.dimension_semantics<parallel>], iteration_bounds = array<i64: 1>, scalar_prefetch = 0 : i64, scratch_operands = 0 : i64, tpu.core_type = #tpu.core_type<tc>, window_params = [{transform_indices = @transform_0, window_bounds = array<i64: 16, 32>}, {pipeline_mode = #tpu.pipeline_mode<synchronous>, transform_indices = @transform_1, window_bounds = array<i64: 32, 512>}, {pipeline_mode = #tpu.pipeline_mode<synchronous>, transform_indices = @transform_2, window_bounds = array<i64: 1, 512>}, {pipeline_mode = #tpu.pipeline_mode<synchronous>, transform_indices = @transform_3, window_bounds = array<i64: 512, 256>}, {pipeline_mode = #tpu.pipeline_mode<synchronous>, transform_indices = @transform_4, window_bounds = array<i64: 1, 256>}, {pipeline_mode = #tpu.pipeline_mode<synchronous>, transform_indices = @transform_5, window_bounds = array<i64: 256, 3>}, {pipeline_mode = #tpu.pipeline_mode<synchronous>, transform_indices = @transform_6, window_bounds = array<i64: 1, 3>}, {transform_indices = @transform_7, window_bounds = array<i64: 16, 3>}]} {
    %c0 = arith.constant 0 : index
    %c0_0 = arith.constant 0 : index
    %0 = vector.load %arg1[%c0, %c0_0] : memref<16x32xf32, #tpu.memory_space<vmem>>, vector<16x32xf32>
    %1 = arith.truncf %0 : vector<16x32xf32> to vector<16x32xbf16>
    %c0_1 = arith.constant 0 : index
    %c0_2 = arith.constant 0 : index
    %2 = vector.load %arg2[%c0_1, %c0_2] : memref<32x512xbf16, #tpu.memory_space<vmem>>, vector<32x512xbf16>
    %cst = arith.constant dense<0.000000e+00> : vector<16x512xf32>
    %3 = tpu.matmul %1, %2, %cst {dimension_numbers = #tpu.dot_dimension_numbers<[1], [0], [0], [1], [0, 0, 1, 1], [], []>} : vector<16x32xbf16>, vector<32x512xbf16>, vector<16x512xf32> -> vector<16x512xf32>
    %c0_3 = arith.constant 0 : index
    %c0_4 = arith.constant 0 : index
    %4 = vector.load %arg3[%c0_3, %c0_4] : memref<1x512xf32, #tpu.memory_space<vmem>>, vector<1x512xf32>
    %5 = vector.broadcast %4 : vector<1x512xf32> to vector<16x512xf32>
    %6 = arith.addf %3, %5 : vector<16x512xf32>
    %cst_5 = arith.constant 2.000000e-01 : f32
    %7 = vector.broadcast %cst_5 : f32 to vector<16x512xf32>
    %8 = arith.mulf %7, %6 : vector<16x512xf32>
    %9 = arith.maximumf %6, %8 : vector<16x512xf32>
    %10 = arith.truncf %9 : vector<16x512xf32> to vector<16x512xbf16>
    %c0_6 = arith.constant 0 : index
    %c0_7 = arith.constant 0 : index
    %11 = vector.load %arg4[%c0_6, %c0_7] : memref<512x256xbf16, #tpu.memory_space<vmem>>, vector<512x256xbf16>
    %cst_8 = arith.constant dense<0.000000e+00> : vector<16x256xf32>
    %12 = tpu.matmul %10, %11, %cst_8 {dimension_numbers = #tpu.dot_dimension_numbers<[1], [0], [0], [1], [0, 0, 1, 1], [], []>} : vector<16x512xbf16>, vector<512x256xbf16>, vector<16x256xf32> -> vector<16x256xf32>
    %c0_9 = arith.constant 0 : index
    %c0_10 = arith.constant 0 : index
    %13 = vector.load %arg5[%c0_9, %c0_10] : memref<1x256xf32, #tpu.memory_space<vmem>>, vector<1x256xf32>
    %14 = vector.broadcast %13 : vector<1x256xf32> to vector<16x256xf32>
    %15 = arith.addf %12, %14 : vector<16x256xf32>
    %cst_11 = arith.constant 2.000000e-01 : f32
    %16 = vector.broadcast %cst_11 : f32 to vector<16x256xf32>
    %17 = arith.mulf %16, %15 : vector<16x256xf32>
    %18 = arith.maximumf %15, %17 : vector<16x256xf32>
    %19 = arith.truncf %18 : vector<16x256xf32> to vector<16x256xbf16>
    %c0_12 = arith.constant 0 : index
    %c0_13 = arith.constant 0 : index
    %20 = vector.load %arg6[%c0_12, %c0_13] : memref<256x3xbf16, #tpu.memory_space<vmem>>, vector<256x3xbf16>
    %cst_14 = arith.constant dense<0.000000e+00> : vector<16x3xf32>
    %21 = tpu.matmul %19, %20, %cst_14 {dimension_numbers = #tpu.dot_dimension_numbers<[1], [0], [0], [1], [0, 0, 1, 1], [], []>} : vector<16x256xbf16>, vector<256x3xbf16>, vector<16x3xf32> -> vector<16x3xf32>
    %c0_15 = arith.constant 0 : index
    %c0_16 = arith.constant 0 : index
    %22 = vector.load %arg7[%c0_15, %c0_16] : memref<1x3xf32, #tpu.memory_space<vmem>>, vector<1x3xf32>
    %23 = vector.broadcast %22 : vector<1x3xf32> to vector<16x3xf32>
    %24 = arith.addf %21, %23 : vector<16x3xf32>
    %cst_17 = arith.constant 2.000000e-01 : f32
    %25 = vector.broadcast %cst_17 : f32 to vector<16x3xf32>
    %26 = arith.mulf %25, %24 : vector<16x3xf32>
    %27 = arith.maximumf %24, %26 : vector<16x3xf32>
    %c0_18 = arith.constant 0 : index
    %c0_19 = arith.constant 0 : index
    %28 = vector.load %arg8[%c0_18, %c0_19] : memref<16x3xf32, #tpu.memory_space<vmem>>, vector<16x3xf32>
    tpu.vector_store %arg8[%c0_18, %c0_19], %27 {strides = array<i32>} : memref<16x3xf32, #tpu.memory_space<vmem>>, vector<16x3xf32>,
    return
  }
  func.func @transform_0(%arg0: i32) -> (i32, i32) {
    %c0_i32 = arith.constant 0 : i32
    %c0_i32_0 = arith.constant 0 : i32
    return %arg0, %c0_i32 : i32, i32
  }
  func.func @transform_1(%arg0: i32) -> (i32, i32) {
    %c0_i32 = arith.constant 0 : i32
    %c0_i32_0 = arith.constant 0 : i32
    %c0_i32_1 = arith.constant 0 : i32
    return %c0_i32, %c0_i32_0 : i32, i32
  }
  func.func @transform_2(%arg0: i32) -> (i32, i32) {
    %c0_i32 = arith.constant 0 : i32
    %c0_i32_0 = arith.constant 0 : i32
    %c0_i32_1 = arith.constant 0 : i32
    return %c0_i32, %c0_i32_0 : i32, i32
  }
  func.func @transform_3(%arg0: i32) -> (i32, i32) {
    %c0_i32 = arith.constant 0 : i32
    %c0_i32_0 = arith.constant 0 : i32
    %c0_i32_1 = arith.constant 0 : i32
    return %c0_i32, %c0_i32_0 : i32, i32
  }
  func.func @transform_4(%arg0: i32) -> (i32, i32) {
    %c0_i32 = arith.constant 0 : i32
    %c0_i32_0 = arith.constant 0 : i32
    %c0_i32_1 = arith.constant 0 : i32
    return %c0_i32, %c0_i32_0 : i32, i32
  }
  func.func @transform_5(%arg0: i32) -> (i32, i32) {
    %c0_i32 = arith.constant 0 : i32
    %c0_i32_0 = arith.constant 0 : i32
    %c0_i32_1 = arith.constant 0 : i32
    return %c0_i32, %c0_i32_0 : i32, i32
  }
  func.func @transform_6(%arg0: i32) -> (i32, i32) {
    %c0_i32 = arith.constant 0 : i32
    %c0_i32_0 = arith.constant 0 : i32
    %c0_i32_1 = arith.constant 0 : i32
    return %c0_i32, %c0_i32_0 : i32, i32
  }
  func.func @transform_7(%arg0: i32) -> (i32, i32) {
    %c0_i32 = arith.constant 0 : i32
    %c0_i32_0 = arith.constant 0 : i32
    return %arg0, %c0_i32 : i32, i32
  }
}

</mosaic_0001>

<llo_original>
// kernel: classifier_forward.1
$region0: #{classifier_forward.1}
  #allocation0 [shape = 'u32[]', space=smem, size = 0x4, offset = 0x4, fixed_abs, tag = 'smem constant byte address 0x4 - core index']
  #allocation1 [shape = 'u32[144,128]{1,0:T(1,128)}', space=vmem, size = 0x12000, scoped, tag = 'internal scratch']
  %s0 = inlined_call_operand.vmem [shape: f32[16,32], index: 0, kind: input, shape index: {}]
  %s1 = inlined_call_operand.vmem [shape: bf16[32,512], index: 1, kind: input, shape index: {}]
  %s2 = inlined_call_operand.vmem [shape: f32[1,512], index: 2, kind: input, shape index: {}]
  %s3 = inlined_call_operand.vmem [shape: bf16[512,256], index: 3, kind: input, shape index: {}]
  %s4 = inlined_call_operand.vmem [shape: f32[1,256], index: 4, kind: input, shape index: {}]
  %s5 = inlined_call_operand.vmem [shape: bf16[256,3], index: 5, kind: input, shape index: {}]
  %s6 = inlined_call_operand.vmem [shape: f32[1,3], index: 6, kind: input, shape index: {}]
  %s7 = inlined_call_operand.vmem [shape: f32[16,3], index: 7, kind: output, shape index: {}]
  %s8 = sld [smem:[#allocation0]]
  $region38: #{classifier_forward.1} parent=0
    _
  %s10 = ssub.s32 1, %s8
  %s11 = scalar_select 0, %s10, %s8
  // Predicated region
  $region2: #{classifier_forward.1} parent=0 // pred_check
    _
  $region3: #{classifier_forward.1} parent=0 // pred_check_branch
    %13 = sbr.rel (0) target = $region5
  $region4: #{classifier_forward.1} parent=0 // pred_region
    _
  $region5: #{classifier_forward.1} parent=0 // pred_fallthru
    _
  // Predicated region
  $region6: #{classifier_forward.1} parent=0 // pred_check
    _
  $region7: #{classifier_forward.1} parent=0 // pred_check_branch
    %15 = sbr.rel (0) target = $region9
  $region8: #{classifier_forward.1} parent=0 // pred_region
    _
  $region9: #{classifier_forward.1} parent=0 // pred_fallthru
    _
  // Predicated region
  $region10: #{classifier_forward.1} parent=0 // pred_check
    _
  $region11: #{classifier_forward.1} parent=0 // pred_check_branch
    %17 = sbr.rel (0) target = $region13
  $region12: #{classifier_forward.1} parent=0 // pred_region
    _
  $region13: #{classifier_forward.1} parent=0 // pred_fallthru
    _
  // Predicated region
  $region14: #{classifier_forward.1} parent=0 // pred_check
    _
  $region15: #{classifier_forward.1} parent=0 // pred_check_branch
    %19 = sbr.rel (0) target = $region17
  $region16: #{classifier_forward.1} parent=0 // pred_region
    _
  $region17: #{classifier_forward.1} parent=0 // pred_fallthru
    _
  // Predicated region
  $region18: #{classifier_forward.1} parent=0 // pred_check
    _
  $region19: #{classifier_forward.1} parent=0 // pred_check_branch
    %21 = sbr.rel (0) target = $region21
  $region20: #{classifier_forward.1} parent=0 // pred_region
    _
  $region21: #{classifier_forward.1} parent=0 // pred_fallthru
    _
  // Predicated region
  $region22: #{classifier_forward.1} parent=0 // pred_check
    _
  $region23: #{classifier_forward.1} parent=0 // pred_check_branch
    %23 = sbr.rel (0) target = $region25
  $region24: #{classifier_forward.1} parent=0 // pred_region
    _
  $region25: #{classifier_forward.1} parent=0 // pred_fallthru
    _
  // Predicated region
  $region26: #{classifier_forward.1} parent=0 // pred_check
    _
  $region27: #{classifier_forward.1} parent=0 // pred_check_branch
    %25 = sbr.rel (0) target = $region29
  $region28: #{classifier_forward.1} parent=0 // pred_region
    _
  $region29: #{classifier_forward.1} parent=0 // pred_fallthru
    _
  %v27 = vld [vmem:[%s0] sm:$0xff]
  %v28 = vld [vmem:[%s0 + $0x8] sm:$0xff]
  %v29 = vpack.c.bf16 %v28, %v27
  %v30 = vld [vmem:[%s1] sm:$0xff]
  %v31 = vld [vmem:[%s1 + $0x8] sm:$0xff]
  %v32 = vld [vmem:[%s1 + $0x10] sm:$0xff]
  %v33 = vld [vmem:[%s1 + $0x18] sm:$0xff]
  %v34 = vld [vmem:[%s1 + $0x20] sm:$0xff]
  %v35 = vld [vmem:[%s1 + $0x28] sm:$0xff]
  %v36 = vld [vmem:[%s1 + $0x30] sm:$0xff]
  %v37 = vld [vmem:[%s1 + $0x38] sm:$0xff]
  %v38 = vld [vmem:[%s2] sm:$0xf]
  %v40 = vlaneseq
  %v41 = vshrl.u32 %v40, 7
  %v42 = vsub.s32 0, %v41
  %v43 = vrot.slane %v38, %v42
  %v44 = vlaneseq
  %v45 = vshrl.u32 %v44, 7
  %v46 = vsub.s32 1, %v45
  %v47 = vrot.slane %v38, %v46
  %v48 = vlaneseq
  %v49 = vshrl.u32 %v48, 7
  %v50 = vsub.s32 2, %v49
  %v51 = vrot.slane %v38, %v50
  %v52 = vlaneseq
  %v53 = vshrl.u32 %v52, 7
  %v54 = vsub.s32 3, %v53
  %v55 = vrot.slane %v38, %v54
  %v68 = vunpack.c.l.b16 %v30
  %v69 = vunpack.c.h.b16 %v30
  %v70 = vunpack.c.l.b16 %v31
  %v71 = vunpack.c.h.b16 %v31
  %v72 = vunpack.c.l.b16 %v32
  %v73 = vunpack.c.h.b16 %v32
  %v74 = vunpack.c.l.b16 %v33
  %v75 = vunpack.c.h.b16 %v33
  %v76 = vunpack.c.l.b16 %v34
  %v77 = vunpack.c.h.b16 %v34
  %v78 = vunpack.c.l.b16 %v35
  %v79 = vunpack.c.h.b16 %v35
  %v80 = vunpack.c.l.b16 %v36
  %v81 = vunpack.c.h.b16 %v36
  %v82 = vunpack.c.l.b16 %v37
  %v83 = vunpack.c.h.b16 %v37
  %v84 = vpack.c.b16 %v72, %v68
  %v85 = vpack.c.b16 %v73, %v69
  %v86 = vpack.c.b16 %v74, %v70
  %v87 = vpack.c.b16 %v75, %v71
  %v88 = vpack.c.b16 %v80, %v76
  %v89 = vpack.c.b16 %v81, %v77
  %v90 = vpack.c.b16 %v82, %v78
  %v91 = vpack.c.b16 %v83, %v79
  %vm100 = vcmask 261120
  %v102 = vsel %vm100, %v29, 0
  %104 = vmatprep.subr.bf16.mxu0 %v85
  %105 = vmatpush1.bf16.msra.mxu0 %v84
  %106 = vmatprep.subr.bf16.mxu0 %v89
  %107 = vmatpush1.bf16.msra.mxu0 %v88
  %108 = vmatprep.subr.bf16.mxu0 0
  %109 = vmatpush1.bf16.msra.mxu0 0
  %110 = vmatprep.subr.bf16.mxu0 0
  %111 = vmatpush1.bf16.msra.mxu0 0
  %112 = vmatprep.subr.bf16.mxu0 0
  %113 = vmatpush1.bf16.msra.mxu0 0
  %114 = vmatprep.subr.bf16.mxu0 0
  %115 = vmatpush1.bf16.msra.mxu0 0
  %116 = vmatprep.subr.bf16.mxu0 0
  %117 = vmatpush1.bf16.msra.mxu0 0
  %118 = vmatprep.subr.bf16.mxu0 0
  %119 = vmatpush1.bf16.msra.mxu0 0
  %120 = vmatprep.subr.bf16.mxu0 0
  %121 = vmatpush1.bf16.msra.mxu0 0
  %122 = vmatprep.subr.bf16.mxu0 0
  %123 = vmatpush1.bf16.msra.mxu0 0
  %124 = vmatprep.subr.bf16.mxu0 0
  %125 = vmatpush1.bf16.msra.mxu0 0
  %126 = vmatprep.subr.bf16.mxu0 0
  %127 = vmatpush1.bf16.msra.mxu0 0
  %128 = vmatprep.subr.bf16.mxu0 0
  %129 = vmatpush1.bf16.msra.mxu0 0
  %130 = vmatprep.subr.bf16.mxu0 0
  %131 = vmatpush1.bf16.msra.mxu0 0
  %132 = vmatprep.subr.bf16.mxu0 0
  %133 = vmatpush1.bf16.msra.mxu0 0
  %134 = vmatprep.subr.bf16.mxu0 0
  %135 = vmatpush1.bf16.msra.mxu0 0
  %136 = vmatprep.mubr.bf16.mxu0 0
  %137 = vmatmul.mubr.bf16.gmra.mrb[0].mxu0 %v102
  %v138 = vpop.f32.mrb[0].mxu0
  %v139 = vadd.f32 %v43, %v138
  %v140 = vpop.f32.mrb[0].mxu0
  %v141 = vadd.f32 %v47, %v140
  %v142 = vpop.f32.mrb[0].mxu0
  %v143 = vadd.f32 %v43, %v142
  %v144 = vpop.f32.mrb[0].mxu0
  %v145 = vadd.f32 %v47, %v144
  %146 = vdwg.mxu0
  %147 = vmatprep.subr.bf16.mxu0 %v87
  %148 = vmatpush1.bf16.msra.mxu0 %v86
  %149 = vmatprep.subr.bf16.mxu0 %v91
  %150 = vmatpush1.bf16.msra.mxu0 %v90
  %151 = vmatprep.subr.bf16.mxu0 0
  %152 = vmatpush1.bf16.msra.mxu0 0
  %153 = vmatprep.subr.bf16.mxu0 0
  %154 = vmatpush1.bf16.msra.mxu0 0
  %155 = vmatprep.subr.bf16.mxu0 0
  %156 = vmatpush1.bf16.msra.mxu0 0
  %157 = vmatprep.subr.bf16.mxu0 0
  %158 = vmatpush1.bf16.msra.mxu0 0
  %159 = vmatprep.subr.bf16.mxu0 0
  %160 = vmatpush1.bf16.msra.mxu0 0
  %161 = vmatprep.subr.bf16.mxu0 0
  %162 = vmatpush1.bf16.msra.mxu0 0
  %163 = vmatprep.subr.bf16.mxu0 0
  %164 = vmatpush1.bf16.msra.mxu0 0
  %165 = vmatprep.subr.bf16.mxu0 0
  %166 = vmatpush1.bf16.msra.mxu0 0
  %167 = vmatprep.subr.bf16.mxu0 0
  %168 = vmatpush1.bf16.msra.mxu0 0
  %169 = vmatprep.subr.bf16.mxu0 0
  %170 = vmatpush1.bf16.msra.mxu0 0
  %171 = vmatprep.subr.bf16.mxu0 0
  %172 = vmatpush1.bf16.msra.mxu0 0
  %173 = vmatprep.subr.bf16.mxu0 0
  %174 = vmatpush1.bf16.msra.mxu0 0
  %175 = vmatprep.subr.bf16.mxu0 0
  %176 = vmatpush1.bf16.msra.mxu0 0
  %177 = vmatprep.subr.bf16.mxu0 0
  %178 = vmatpush1.bf16.msra.mxu0 0
  %179 = vmatprep.mubr.bf16.mxu0 0
  %180 = vmatmul.mubr.bf16.gmra.mrb[0].mxu0 %v102
  %v181 = vpop.f32.mrb[0].mxu0
  %v182 = vadd.f32 %v51, %v181
  %v183 = vpop.f32.mrb[0].mxu0
  %v184 = vadd.f32 %v55, %v183
  %v185 = vpop.f32.mrb[0].mxu0
  %v186 = vadd.f32 %v51, %v185
  %v187 = vpop.f32.mrb[0].mxu0
  %v188 = vadd.f32 %v55, %v187
  %189 = vdwg.mxu0
  %v190 = vmul.f32 %v139, 0.2
  %v191 = vmul.f32 %v141, 0.2
  %v192 = vmul.f32 %v182, 0.2
  %v193 = vmul.f32 %v184, 0.2
  %v194 = vmul.f32 %v143, 0.2
  %v195 = vmul.f32 %v145, 0.2
  %v196 = vmul.f32 %v186, 0.2
  %v197 = vmul.f32 %v188, 0.2
  %v198 = vmax.f32 %v139, %v190
  %v199 = vmax.f32 %v141, %v191
  %v200 = vmax.f32 %v182, %v192
  %v201 = vmax.f32 %v184, %v193
  %v202 = vmax.f32 %v143, %v194
  %v203 = vmax.f32 %v145, %v195
  %v204 = vmax.f32 %v186, %v196
  %v205 = vmax.f32 %v188, %v197
  %v206 = vpack.c.bf16 %v202, %v198
  %v207 = vpack.c.bf16 %v203, %v199
  %v208 = vpack.c.bf16 %v204, %v200
  %v209 = vpack.c.bf16 %v205, %v201
  %v210 = vld [vmem:[%s3] sm:$0xff]
  %v211 = vld [vmem:[%s3 + $0x8] sm:$0xff]
  %v212 = vld [vmem:[%s3 + $0x10] sm:$0xff]
  %v213 = vld [vmem:[%s3 + $0x18] sm:$0xff]
  %v214 = vld [vmem:[%s3 + $0x20] sm:$0xff]
  %v215 = vld [vmem:[%s3 + $0x28] sm:$0xff]
  %v216 = vld [vmem:[%s3 + $0x30] sm:$0xff]
  %v217 = vld [vmem:[%s3 + $0x38] sm:$0xff]
  %v218 = vld [vmem:[%s3 + $0x40] sm:$0xff]
  %v219 = vld [vmem:[%s3 + $0x48] sm:$0xff]
  %v220 = vld [vmem:[%s3 + $0x50] sm:$0xff]
  %v221 = vld [vmem:[%s3 + $0x58] sm:$0xff]
  %v222 = vld [vmem:[%s3 + $0x60] sm:$0xff]
  %v223 = vld [vmem:[%s3 + $0x68] sm:$0xff]
  %v224 = vld [vmem:[%s3 + $0x70] sm:$0xff]
  %v225 = vld [vmem:[%s3 + $0x78] sm:$0xff]
  %v226 = vld [vmem:[%s3 + $0x80] sm:$0xff]
  %v227 = vld [vmem:[%s3 + $0x88] sm:$0xff]
  %v228 = vld [vmem:[%s3 + $0x90] sm:$0xff]
  %v229 = vld [vmem:[%s3 + $0x98] sm:$0xff]
  %v230 = vld [vmem:[%s3 + $0xa0] sm:$0xff]
  %v231 = vld [vmem:[%s3 + $0xa8] sm:$0xff]
  %v232 = vld [vmem:[%s3 + $0xb0] sm:$0xff]
  %v233 = vld [vmem:[%s3 + $0xb8] sm:$0xff]
  %v234 = vld [vmem:[%s3 + $0xc0] sm:$0xff]
  %v235 = vld [vmem:[%s3 + $0xc8] sm:$0xff]
  %v236 = vld [vmem:[%s3 + $0xd0] sm:$0xff]
  %v237 = vld [vmem:[%s3 + $0xd8] sm:$0xff]
  %v238 = vld [vmem:[%s3 + $0xe0] sm:$0xff]
  %v239 = vld [vmem:[%s3 + $0xe8] sm:$0xff]
  %v240 = vld [vmem:[%s3 + $0xf0] sm:$0xff]
  %v241 = vld [vmem:[%s3 + $0xf8] sm:$0xff]
  %v242 = vld [vmem:[%s3 + $0x100] sm:$0xff]
  %v243 = vld [vmem:[%s3 + $0x108] sm:$0xff]
  %v244 = vld [vmem:[%s3 + $0x110] sm:$0xff]
  %v245 = vld [vmem:[%s3 + $0x118] sm:$0xff]
  %v246 = vld [vmem:[%s3 + $0x120] sm:$0xff]
  %v247 = vld [vmem:[%s3 + $0x128] sm:$0xff]
  %v248 = vld [vmem:[%s3 + $0x130] sm:$0xff]
  %v249 = vld [vmem:[%s3 + $0x138] sm:$0xff]
  %v250 = vld [vmem:[%s3 + $0x140] sm:$0xff]
  %v251 = vld [vmem:[%s3 + $0x148] sm:$0xff]
  %v252 = vld [vmem:[%s3 + $0x150] sm:$0xff]
  %v253 = vld [vmem:[%s3 + $0x158] sm:$0xff]
  %v254 = vld [vmem:[%s3 + $0x160] sm:$0xff]
  %v255 = vld [vmem:[%s3 + $0x168] sm:$0xff]
  %v256 = vld [vmem:[%s3 + $0x170] sm:$0xff]
  %v257 = vld [vmem:[%s3 + $0x178] sm:$0xff]
  %v258 = vld [vmem:[%s3 + $0x180] sm:$0xff]
  %v259 = vld [vmem:[%s3 + $0x188] sm:$0xff]
  %v260 = vld [vmem:[%s3 + $0x190] sm:$0xff]
  %v261 = vld [vmem:[%s3 + $0x198] sm:$0xff]
  %v262 = vld [vmem:[%s3 + $0x1a0] sm:$0xff]
  %v263 = vld [vmem:[%s3 + $0x1a8] sm:$0xff]
  %v264 = vld [vmem:[%s3 + $0x1b0] sm:$0xff]
  %v265 = vld [vmem:[%s3 + $0x1b8] sm:$0xff]
  %v266 = vld [vmem:[%s3 + $0x1c0] sm:$0xff]
  %v267 = vld [vmem:[%s3 + $0x1c8] sm:$0xff]
  %v268 = vld [vmem:[%s3 + $0x1d0] sm:$0xff]
  %v269 = vld [vmem:[%s3 + $0x1d8] sm:$0xff]
  %v270 = vld [vmem:[%s3 + $0x1e0] sm:$0xff]
  %v271 = vld [vmem:[%s3 + $0x1e8] sm:$0xff]
  %v272 = vld [vmem:[%s3 + $0x1f0] sm:$0xff]
  %v273 = vld [vmem:[%s3 + $0x1f8] sm:$0xff]
  %v274 = vld [vmem:[%s4] sm:$0x3]
  %v276 = vlaneseq
  %v277 = vshrl.u32 %v276, 7
  %v278 = vsub.s32 0, %v277
  %v279 = vrot.slane %v274, %v278
  %v280 = vlaneseq
  %v281 = vshrl.u32 %v280, 7
  %v282 = vsub.s32 1, %v281
  %v283 = vrot.slane %v274, %v282
  %v350 = vunpack.c.l.b16 %v210
  %v351 = vunpack.c.h.b16 %v210
  %v352 = vunpack.c.l.b16 %v211
  %v353 = vunpack.c.h.b16 %v211
  %v354 = vunpack.c.l.b16 %v212
  %v355 = vunpack.c.h.b16 %v212
  %v356 = vunpack.c.l.b16 %v213
  %v357 = vunpack.c.h.b16 %v213
  %v358 = vunpack.c.l.b16 %v214
  %v359 = vunpack.c.h.b16 %v214
  %v360 = vunpack.c.l.b16 %v215
  %v361 = vunpack.c.h.b16 %v215
  %v362 = vunpack.c.l.b16 %v216
  %v363 = vunpack.c.h.b16 %v216
  %v364 = vunpack.c.l.b16 %v217
  %v365 = vunpack.c.h.b16 %v217
  %v366 = vunpack.c.l.b16 %v218
  %v367 = vunpack.c.h.b16 %v218
  %v368 = vunpack.c.l.b16 %v219
  %v369 = vunpack.c.h.b16 %v219
  %v370 = vunpack.c.l.b16 %v220
  %v371 = vunpack.c.h.b16 %v220
  %v372 = vunpack.c.l.b16 %v221
  %v373 = vunpack.c.h.b16 %v221
  %v374 = vunpack.c.l.b16 %v222
  %v375 = vunpack.c.h.b16 %v222
  %v376 = vunpack.c.l.b16 %v223
  %v377 = vunpack.c.h.b16 %v223
  %v378 = vunpack.c.l.b16 %v224
  %v379 = vunpack.c.h.b16 %v224
  %v380 = vunpack.c.l.b16 %v225
  %v381 = vunpack.c.h.b16 %v225
  %v382 = vunpack.c.l.b16 %v226
  %v383 = vunpack.c.h.b16 %v226
  %v384 = vunpack.c.l.b16 %v227
  %v385 = vunpack.c.h.b16 %v227
  %v386 = vunpack.c.l.b16 %v228
  %v387 = vunpack.c.h.b16 %v228
  %v388 = vunpack.c.l.b16 %v229
  %v389 = vunpack.c.h.b16 %v229
  %v390 = vunpack.c.l.b16 %v230
  %v391 = vunpack.c.h.b16 %v230
  %v392 = vunpack.c.l.b16 %v231
  %v393 = vunpack.c.h.b16 %v231
  %v394 = vunpack.c.l.b16 %v232
  %v395 = vunpack.c.h.b16 %v232
  %v396 = vunpack.c.l.b16 %v233
  %v397 = vunpack.c.h.b16 %v233
  %v398 = vunpack.c.l.b16 %v234
  %v399 = vunpack.c.h.b16 %v234
  %v400 = vunpack.c.l.b16 %v235
  %v401 = vunpack.c.h.b16 %v235
  %v402 = vunpack.c.l.b16 %v236
  %v403 = vunpack.c.h.b16 %v236
  %v404 = vunpack.c.l.b16 %v237
  %v405 = vunpack.c.h.b16 %v237
  %v406 = vunpack.c.l.b16 %v238
  %v407 = vunpack.c.h.b16 %v238
  %v408 = vunpack.c.l.b16 %v239
  %v409 = vunpack.c.h.b16 %v239
  %v410 = vunpack.c.l.b16 %v240
  %v411 = vunpack.c.h.b16 %v240
  %v412 = vunpack.c.l.b16 %v241
  %v413 = vunpack.c.h.b16 %v241
  %v414 = vunpack.c.l.b16 %v242
  %v415 = vunpack.c.h.b16 %v242
  %v416 = vunpack.c.l.b16 %v243
  %v417 = vunpack.c.h.b16 %v243
  %v418 = vunpack.c.l.b16 %v244
  %v419 = vunpack.c.h.b16 %v244
  %v420 = vunpack.c.l.b16 %v245
  %v421 = vunpack.c.h.b16 %v245
  %v422 = vunpack.c.l.b16 %v246
  %v423 = vunpack.c.h.b16 %v246
  %v424 = vunpack.c.l.b16 %v247
  %v425 = vunpack.c.h.b16 %v247
  %v426 = vunpack.c.l.b16 %v248
  %v427 = vunpack.c.h.b16 %v248
  %v428 = vunpack.c.l.b16 %v249
  %v429 = vunpack.c.h.b16 %v249
  %v430 = vunpack.c.l.b16 %v250
  %v431 = vunpack.c.h.b16 %v250
  %v432 = vunpack.c.l.b16 %v251
  %v433 = vunpack.c.h.b16 %v251
  %v434 = vunpack.c.l.b16 %v252
  %v435 = vunpack.c.h.b16 %v252
  %v436 = vunpack.c.l.b16 %v253
  %v437 = vunpack.c.h.b16 %v253
  %v438 = vunpack.c.l.b16 %v254
  %v439 = vunpack.c.h.b16 %v254
  %v440 = vunpack.c.l.b16 %v255
  %v441 = vunpack.c.h.b16 %v255
  %v442 = vunpack.c.l.b16 %v256
  %v443 = vunpack.c.h.b16 %v256
  %v444 = vunpack.c.l.b16 %v257
  %v445 = vunpack.c.h.b16 %v257
  %v446 = vunpack.c.l.b16 %v258
  %v447 = vunpack.c.h.b16 %v258
  %v448 = vunpack.c.l.b16 %v259
  %v449 = vunpack.c.h.b16 %v259
  %v450 = vunpack.c.l.b16 %v260
  %v451 = vunpack.c.h.b16 %v260
  %v452 = vunpack.c.l.b16 %v261
  %v453 = vunpack.c.h.b16 %v261
  %v454 = vunpack.c.l.b16 %v262
  %v455 = vunpack.c.h.b16 %v262
  %v456 = vunpack.c.l.b16 %v263
  %v457 = vunpack.c.h.b16 %v263
  %v458 = vunpack.c.l.b16 %v264
  %v459 = vunpack.c.h.b16 %v264
  %v460 = vunpack.c.l.b16 %v265
  %v461 = vunpack.c.h.b16 %v265
  %v462 = vunpack.c.l.b16 %v266
  %v463 = vunpack.c.h.b16 %v266
  %v464 = vunpack.c.l.b16 %v267
  %v465 = vunpack.c.h.b16 %v267
  %v466 = vunpack.c.l.b16 %v268
  %v467 = vunpack.c.h.b16 %v268
  %v468 = vunpack.c.l.b16 %v269
  %v469 = vunpack.c.h.b16 %v269
  %v470 = vunpack.c.l.b16 %v270
  %v471 = vunpack.c.h.b16 %v270
  %v472 = vunpack.c.l.b16 %v271
  %v473 = vunpack.c.h.b16 %v271
  %v474 = vunpack.c.l.b16 %v272
  %v475 = vunpack.c.h.b16 %v272
  %v476 = vunpack.c.l.b16 %v273
  %v477 = vunpack.c.h.b16 %v273
  %v478 = vpack.c.b16 %v352, %v350
  %v479 = vpack.c.b16 %v353, %v351
  %v480 = vpack.c.b16 %v356, %v354
  %v481 = vpack.c.b16 %v357, %v355
  %v482 = vpack.c.b16 %v360, %v358
  %v483 = vpack.c.b16 %v361, %v359
  %v484 = vpack.c.b16 %v364, %v362
  %v485 = vpack.c.b16 %v365, %v363
  %v486 = vpack.c.b16 %v368, %v366
  %v487 = vpack.c.b16 %v369, %v367
  %v488 = vpack.c.b16 %v372, %v370
  %v489 = vpack.c.b16 %v373, %v371
  %v490 = vpack.c.b16 %v376, %v374
  %v491 = vpack.c.b16 %v377, %v375
  %v492 = vpack.c.b16 %v380, %v378
  %v493 = vpack.c.b16 %v381, %v379
  %v494 = vpack.c.b16 %v384, %v382
  %v495 = vpack.c.b16 %v385, %v383
  %v496 = vpack.c.b16 %v388, %v386
  %v497 = vpack.c.b16 %v389, %v387
  %v498 = vpack.c.b16 %v392, %v390
  %v499 = vpack.c.b16 %v393, %v391
  %v500 = vpack.c.b16 %v396, %v394
  %v501 = vpack.c.b16 %v397, %v395
  %v502 = vpack.c.b16 %v400, %v398
  %v503 = vpack.c.b16 %v401, %v399
  %v504 = vpack.c.b16 %v404, %v402
  %v505 = vpack.c.b16 %v405, %v403
  %v506 = vpack.c.b16 %v408, %v406
  %v507 = vpack.c.b16 %v409, %v407
  %v508 = vpack.c.b16 %v412, %v410
  %v509 = vpack.c.b16 %v413, %v411
  %v510 = vpack.c.b16 %v416, %v414
  %v511 = vpack.c.b16 %v417, %v415
  %v512 = vpack.c.b16 %v420, %v418
  %v513 = vpack.c.b16 %v421, %v419
  %v514 = vpack.c.b16 %v424, %v422
  %v515 = vpack.c.b16 %v425, %v423
  %v516 = vpack.c.b16 %v428, %v426
  %v517 = vpack.c.b16 %v429, %v427
  %v518 = vpack.c.b16 %v432, %v430
  %v519 = vpack.c.b16 %v433, %v431
  %v520 = vpack.c.b16 %v436, %v434
  %v521 = vpack.c.b16 %v437, %v435
  %v522 = vpack.c.b16 %v440, %v438
  %v523 = vpack.c.b16 %v441, %v439
  %v524 = vpack.c.b16 %v444, %v442
  %v525 = vpack.c.b16 %v445, %v443
  %v526 = vpack.c.b16 %v448, %v446
  %v527 = vpack.c.b16 %v449, %v447
  %v528 = vpack.c.b16 %v452, %v450
  %v529 = vpack.c.b16 %v453, %v451
  %v530 = vpack.c.b16 %v456, %v454
  %v531 = vpack.c.b16 %v457, %v455
  %v532 = vpack.c.b16 %v460, %v458
  %v533 = vpack.c.b16 %v461, %v459
  %v534 = vpack.c.b16 %v464, %v462
  %v535 = vpack.c.b16 %v465, %v463
  %v536 = vpack.c.b16 %v468, %v466
  %v537 = vpack.c.b16 %v469, %v467
  %v538 = vpack.c.b16 %v472, %v470
  %v539 = vpack.c.b16 %v473, %v471
  %v540 = vpack.c.b16 %v476, %v474
  %v541 = vpack.c.b16 %v477, %v475
  %606 = vmatprep.subr.bf16.mxu0 %v479
  %607 = vmatpush1.bf16.msra.mxu0 %v478
  %608 = vmatprep.subr.bf16.mxu0 %v481
  %609 = vmatpush1.bf16.msra.mxu0 %v480
  %610 = vmatprep.subr.bf16.mxu0 %v483
  %611 = vmatpush1.bf16.msra.mxu0 %v482
  %612 = vmatprep.subr.bf16.mxu0 %v485
  %613 = vmatpush1.bf16.msra.mxu0 %v484
  %614 = vmatprep.subr.bf16.mxu0 %v487
  %615 = vmatpush1.bf16.msra.mxu0 %v486
  %616 = vmatprep.subr.bf16.mxu0 %v489
  %617 = vmatpush1.bf16.msra.mxu0 %v488
  %618 = vmatprep.subr.bf16.mxu0 %v491
  %619 = vmatpush1.bf16.msra.mxu0 %v490
  %620 = vmatprep.subr.bf16.mxu0 %v493
  %621 = vmatpush1.bf16.msra.mxu0 %v492
  %622 = vmatprep.subr.bf16.mxu0 %v495
  %623 = vmatpush1.bf16.msra.mxu0 %v494
  %624 = vmatprep.subr.bf16.mxu0 %v497
  %625 = vmatpush1.bf16.msra.mxu0 %v496
  %626 = vmatprep.subr.bf16.mxu0 %v499
  %627 = vmatpush1.bf16.msra.mxu0 %v498
  %628 = vmatprep.subr.bf16.mxu0 %v501
  %629 = vmatpush1.bf16.msra.mxu0 %v500
  %630 = vmatprep.subr.bf16.mxu0 %v503
  %631 = vmatpush1.bf16.msra.mxu0 %v502
  %632 = vmatprep.subr.bf16.mxu0 %v505
  %633 = vmatpush1.bf16.msra.mxu0 %v504
  %634 = vmatprep.subr.bf16.mxu0 %v507
  %635 = vmatpush1.bf16.msra.mxu0 %v506
  %636 = vmatprep.subr.bf16.mxu0 %v509
  %637 = vmatpush1.bf16.msra.mxu0 %v508
  %638 = vmatprep.mubr.bf16.mxu0 %v207
  %639 = vmatmul.mubr.bf16.gmra.mrb[0].mxu0 %v206
  %v640 = vpop.f32.mrb[0].mxu0
  %v641 = vadd.f32 %v279, %v640
  %v642 = vpop.f32.mrb[0].mxu0
  %v643 = vadd.f32 %v283, %v642
  %v644 = vpop.f32.mrb[0].mxu0
  %v645 = vadd.f32 %v279, %v644
  %v646 = vpop.f32.mrb[0].mxu0
  %v647 = vadd.f32 %v283, %v646
  %648 = vdwg.mxu0
  %649 = vmatprep.subr.bf16.mxu0 %v511
  %650 = vmatpush1.bf16.msra.mxu0 %v510
  %651 = vmatprep.subr.bf16.mxu0 %v513
  %652 = vmatpush1.bf16.msra.mxu0 %v512
  %653 = vmatprep.subr.bf16.mxu0 %v515
  %654 = vmatpush1.bf16.msra.mxu0 %v514
  %655 = vmatprep.subr.bf16.mxu0 %v517
  %656 = vmatpush1.bf16.msra.mxu0 %v516
  %657 = vmatprep.subr.bf16.mxu0 %v519
  %658 = vmatpush1.bf16.msra.mxu0 %v518
  %659 = vmatprep.subr.bf16.mxu0 %v521
  %660 = vmatpush1.bf16.msra.mxu0 %v520
  %661 = vmatprep.subr.bf16.mxu0 %v523
  %662 = vmatpush1.bf16.msra.mxu0 %v522
  %663 = vmatprep.subr.bf16.mxu0 %v525
  %664 = vmatpush1.bf16.msra.mxu0 %v524
  %665 = vmatprep.subr.bf16.mxu0 %v527
  %666 = vmatpush1.bf16.msra.mxu0 %v526
  %667 = vmatprep.subr.bf16.mxu0 %v529
  %668 = vmatpush1.bf16.msra.mxu0 %v528
  %669 = vmatprep.subr.bf16.mxu0 %v531
  %670 = vmatpush1.bf16.msra.mxu0 %v530
  %671 = vmatprep.subr.bf16.mxu0 %v533
  %672 = vmatpush1.bf16.msra.mxu0 %v532
  %673 = vmatprep.subr.bf16.mxu0 %v535
  %674 = vmatpush1.bf16.msra.mxu0 %v534
  %675 = vmatprep.subr.bf16.mxu0 %v537
  %676 = vmatpush1.bf16.msra.mxu0 %v536
  %677 = vmatprep.subr.bf16.mxu0 %v539
  %678 = vmatpush1.bf16.msra.mxu0 %v538
  %679 = vmatprep.subr.bf16.mxu0 %v541
  %680 = vmatpush1.bf16.msra.mxu0 %v540
  %681 = vmatprep.mubr.bf16.mxu0 %v209
  %682 = vmatmul.mubr.bf16.gmra.mrb[0].mxu0 %v208
  %v683 = vpop.f32.mrb[0].mxu0
  %v684 = vadd.f32 %v641, %v683
  %v685 = vpop.f32.mrb[0].mxu0
  %v686 = vadd.f32 %v643, %v685
  %v687 = vpop.f32.mrb[0].mxu0
  %v688 = vadd.f32 %v645, %v687
  %v689 = vpop.f32.mrb[0].mxu0
  %v690 = vadd.f32 %v647, %v689
  %691 = vdwg.mxu0
  %v692 = vmul.f32 %v684, 0.2
  %v693 = vmul.f32 %v686, 0.2
  %v694 = vmul.f32 %v688, 0.2
  %v695 = vmul.f32 %v690, 0.2
  %v696 = vmax.f32 %v684, %v692
  %v697 = vmax.f32 %v686, %v693
  %v698 = vmax.f32 %v688, %v694
  %v699 = vmax.f32 %v690, %v695
  %v700 = vpack.c.bf16 %v698, %v696
  %v701 = vpack.c.bf16 %v699, %v697
  %v702 = vld [vmem:[%s5] sm:$0xf]
  %v703 = vld [vmem:[%s5 + $0x4] sm:$0xf]
  %v704 = vld [vmem:[%s5 + $0x8] sm:$0xf]
  %v705 = vld [vmem:[%s5 + $0xc] sm:$0xf]
  %v706 = vld [vmem:[%s5 + $0x10] sm:$0xf]
  %v707 = vld [vmem:[%s5 + $0x14] sm:$0xf]
  %v708 = vld [vmem:[%s5 + $0x18] sm:$0xf]
  %v709 = vld [vmem:[%s5 + $0x1c] sm:$0xf]
  %v710 = vld [vmem:[%s5 + $0x20] sm:$0xf]
  %v711 = vld [vmem:[%s5 + $0x24] sm:$0xf]
  %v712 = vld [vmem:[%s5 + $0x28] sm:$0xf]
  %v713 = vld [vmem:[%s5 + $0x2c] sm:$0xf]
  %v714 = vld [vmem:[%s5 + $0x30] sm:$0xf]
  %v715 = vld [vmem:[%s5 + $0x34] sm:$0xf]
  %v716 = vld [vmem:[%s5 + $0x38] sm:$0xf]
  %v717 = vld [vmem:[%s5 + $0x3c] sm:$0xf]
  %v718 = vld [vmem:[%s5 + $0x40] sm:$0xf]
  %v719 = vld [vmem:[%s5 + $0x44] sm:$0xf]
  %v720 = vld [vmem:[%s5 + $0x48] sm:$0xf]
  %v721 = vld [vmem:[%s5 + $0x4c] sm:$0xf]
  %v722 = vld [vmem:[%s5 + $0x50] sm:$0xf]
  %v723 = vld [vmem:[%s5 + $0x54] sm:$0xf]
  %v724 = vld [vmem:[%s5 + $0x58] sm:$0xf]
  %v725 = vld [vmem:[%s5 + $0x5c] sm:$0xf]
  %v726 = vld [vmem:[%s5 + $0x60] sm:$0xf]
  %v727 = vld [vmem:[%s5 + $0x64] sm:$0xf]
  %v728 = vld [vmem:[%s5 + $0x68] sm:$0xf]
  %v729 = vld [vmem:[%s5 + $0x6c] sm:$0xf]
  %v730 = vld [vmem:[%s5 + $0x70] sm:$0xf]
  %v731 = vld [vmem:[%s5 + $0x74] sm:$0xf]
  %v732 = vld [vmem:[%s5 + $0x78] sm:$0xf]
  %v733 = vld [vmem:[%s5 + $0x7c] sm:$0xf]
  %v734 = vld [vmem:[%s6] sm:$0x1]
  %v736 = vlaneseq
  %v737 = vshrl.u32 %v736, 7
  %v738 = vsub.s32 0, %v737
  %v739 = vrot.slane %v734, %v738
  %v773 = vunpack.c.l.b16 %v702
  %v774 = vunpack.c.l.b16 %v703
  %v775 = vunpack.c.l.b16 %v704
  %v776 = vunpack.c.l.b16 %v705
  %v777 = vunpack.c.l.b16 %v706
  %v778 = vunpack.c.l.b16 %v707
  %v779 = vunpack.c.l.b16 %v708
  %v780 = vunpack.c.l.b16 %v709
  %v781 = vunpack.c.l.b16 %v710
  %v782 = vunpack.c.l.b16 %v711
  %v783 = vunpack.c.l.b16 %v712
  %v784 = vunpack.c.l.b16 %v713
  %v785 = vunpack.c.l.b16 %v714
  %v786 = vunpack.c.l.b16 %v715
  %v787 = vunpack.c.l.b16 %v716
  %v788 = vunpack.c.l.b16 %v717
  %v789 = vunpack.c.l.b16 %v718
  %v790 = vunpack.c.l.b16 %v719
  %v791 = vunpack.c.l.b16 %v720
  %v792 = vunpack.c.l.b16 %v721
  %v793 = vunpack.c.l.b16 %v722
  %v794 = vunpack.c.l.b16 %v723
  %v795 = vunpack.c.l.b16 %v724
  %v796 = vunpack.c.l.b16 %v725
  %v797 = vunpack.c.l.b16 %v726
  %v798 = vunpack.c.l.b16 %v727
  %v799 = vunpack.c.l.b16 %v728
  %v800 = vunpack.c.l.b16 %v729
  %v801 = vunpack.c.l.b16 %v730
  %v802 = vunpack.c.l.b16 %v731
  %v803 = vunpack.c.l.b16 %v732
  %v804 = vunpack.c.l.b16 %v733
  %v805 = vpack.c.b16 %v774, %v773
  %v806 = vpack.c.b16 %v776, %v775
  %v807 = vpack.c.b16 %v778, %v777
  %v808 = vpack.c.b16 %v780, %v779
  %v809 = vpack.c.b16 %v782, %v781
  %v810 = vpack.c.b16 %v784, %v783
  %v811 = vpack.c.b16 %v786, %v785
  %v812 = vpack.c.b16 %v788, %v787
  %v813 = vpack.c.b16 %v790, %v789
  %v814 = vpack.c.b16 %v792, %v791
  %v815 = vpack.c.b16 %v794, %v793
  %v816 = vpack.c.b16 %v796, %v795
  %v817 = vpack.c.b16 %v798, %v797
  %v818 = vpack.c.b16 %v800, %v799
  %v819 = vpack.c.b16 %v802, %v801
  %v820 = vpack.c.b16 %v804, %v803
  %837 = vmatprep.subr.bf16.mxu0 0
  %838 = vmatpush1.bf16.msra.mxu0 %v805
  %839 = vmatprep.subr.bf16.mxu0 0
  %840 = vmatpush1.bf16.msra.mxu0 %v806
  %841 = vmatprep.subr.bf16.mxu0 0
  %842 = vmatpush1.bf16.msra.mxu0 %v807
  %843 = vmatprep.subr.bf16.mxu0 0
  %844 = vmatpush1.bf16.msra.mxu0 %v808
  %845 = vmatprep.subr.bf16.mxu0 0
  %846 = vmatpush1.bf16.msra.mxu0 %v809
  %847 = vmatprep.subr.bf16.mxu0 0
  %848 = vmatpush1.bf16.msra.mxu0 %v810
  %849 = vmatprep.subr.bf16.mxu0 0
  %850 = vmatpush1.bf16.msra.mxu0 %v811
  %851 = vmatprep.subr.bf16.mxu0 0
  %852 = vmatpush1.bf16.msra.mxu0 %v812
  %853 = vmatprep.subr.bf16.mxu0 0
  %854 = vmatpush1.bf16.msra.mxu0 %v813
  %855 = vmatprep.subr.bf16.mxu0 0
  %856 = vmatpush1.bf16.msra.mxu0 %v814
  %857 = vmatprep.subr.bf16.mxu0 0
  %858 = vmatpush1.bf16.msra.mxu0 %v815
  %859 = vmatprep.subr.bf16.mxu0 0
  %860 = vmatpush1.bf16.msra.mxu0 %v816
  %861 = vmatprep.subr.bf16.mxu0 0
  %862 = vmatpush1.bf16.msra.mxu0 %v817
  %863 = vmatprep.subr.bf16.mxu0 0
  %864 = vmatpush1.bf16.msra.mxu0 %v818
  %865 = vmatprep.subr.bf16.mxu0 0
  %866 = vmatpush1.bf16.msra.mxu0 %v819
  %867 = vmatprep.subr.bf16.mxu0 0
  %868 = vmatpush1.bf16.msra.mxu0 %v820
  %869 = vmatprep.mubr.bf16.mxu0 %v701
  %870 = vmatmul.mubr.bf16.gmra.mrb[0].mxu0 %v700
  %v871 = vpop.f32.mrb[0].mxu0
  %v872 = vadd.f32 %v739, %v871
  %v873 = vpop.f32.mrb[0].mxu0
  %v874 = vpop.f32.mrb[0].mxu0
  %v875 = vadd.f32 %v739, %v874
  %v876 = vpop.f32.mrb[0].mxu0
  %877 = vdwg.mxu0
  %v878 = vmul.f32 %v872, 0.2
  %v879 = vmul.f32 %v875, 0.2
  %v880 = vmax.f32 %v872, %v878
  %v881 = vmax.f32 %v875, %v879
  %vm882 = vcmask 23552
  %883 = vst.msk [vmem:[%s7] sm:$0xff] %vm882, %v880
  %884 = vst.msk [vmem:[%s7 + $0x8] sm:$0xff] %vm882, %v881
  // Predicated region
  $region30: #{classifier_forward.1} parent=0 // pred_check
    _
  $region31: #{classifier_forward.1} parent=0 // pred_check_branch
    %886 = sbr.rel (0) target = $region33
  $region32: #{classifier_forward.1} parent=0 // pred_region
    _
  $region33: #{classifier_forward.1} parent=0 // pred_fallthru
    _
  // Predicated region
  $region34: #{classifier_forward.1} parent=0 // pred_check
    _
  $region35: #{classifier_forward.1} parent=0 // pred_check_branch
    %888 = sbr.rel (0) target = $region37
  $region36: #{classifier_forward.1} parent=0 // pred_region
    _
  $region37: #{classifier_forward.1} parent=0 // pred_fallthru
    _

</llo_original>
